<compile_context>
chip_gen: v6e
topology: v6e:2x2x1
jax: 0.10.0
libtpu: 0.0.40
codegen_flags: <defaults>
</compile_context>

<pallas_src>
import jax
import jax.numpy as jnp
from jax import lax
from jax.experimental import pallas as pl
from jax.experimental.pallas import tpu as pltpu


def _make_prop_kernel(gdep: int, alpha: float):
    alpha = float(alpha)

    def kernel(x_ref, a_ref, o_ref):
        # x_ref: (V, TN)  bf16 slab; columns are independent (b, c, l) tuples
        # a_ref: (V, V)   bf16 row-normalized adjacency, pre-scaled by (1-alpha)
        # o_ref: (V, TN)  f32 propagated slab
        a = a_ref[...]
        x32 = x_ref[...].astype(jnp.float32)
        ax = alpha * x32                        # loop-invariant, hoisted
        h = x32
        for _ in range(gdep):                   # gdep is small (typically 2-3)
            h = ax + jnp.dot(a, h.astype(a.dtype),
                             preferred_element_type=jnp.float32)
        o_ref[...] = h.astype(o_ref.dtype)

    return kernel


def _pick_block_lanes(n_lanes: int, bytes_per_lane: int,
                      vmem_budget: int = 12 << 20, min_grid: int = 4) -> int:
    """Lane width of one block: a multiple of 128 that fits `vmem_budget`,
    is large enough to amortize per-grid-step overhead, and (when there is
    enough work) leaves >= `min_grid` grid steps for pipelining / megacore."""
    units = pl.cdiv(n_lanes, 128)                       # needed 128-lane units
    cap = max(1, int(vmem_budget) // (128 * max(int(bytes_per_lane), 1)))
    want_big = min(units, 16)                           # >= 2048 lanes if avail
    want_steps = pl.cdiv(units, min_grid)               # >= min_grid grid steps
    return 128 * max(1, min(units, cap, max(want_big, want_steps)))


def prop_forward_pallas(x, adj, weight, bias, *, gdep: int, alpha: float,
                        compute_dtype=jnp.bfloat16):
    """x: (B, C_in, V, L); adj: (V, V); weight: (C_out, C_in) (squeezed 1x1
    conv kernel); bias: (C_out,).  Returns (B, C_out, V, L) float32."""
    B, C, V, L = x.shape
    O = weight.shape[0]
    alpha = float(alpha)

    x = x.astype(jnp.float32)
    w = weight.astype(jnp.float32)
    b = bias.astype(jnp.float32)

    # Row-normalized adjacency with self-loops; fold (1 - alpha) in once.
    adj_i = adj.astype(jnp.float32) + jnp.eye(V, dtype=jnp.float32)
    a = (1.0 - alpha) * adj_i / jnp.sum(adj_i, axis=1, keepdims=True)

    # The 1x1 conv (channel mix) commutes with propagation (node mix), so
    # apply it outside the kernel on whichever side has fewer channels.
    conv_first = O < C
    xin = jnp.einsum('oc,bcvl->bovl', w, x) if conv_first else x
    Ck = O if conv_first else C

    # Lane-dense slab (V, B*Ck*L): each propagation step is ONE matmul.
    N = B * Ck * L
    xk = jnp.transpose(xin, (2, 0, 1, 3)).reshape(V, N).astype(compute_dtype)
    ak = a.astype(compute_dtype)

    in_bytes = jnp.finfo(compute_dtype).bits // 8
    # double-buffered in + out blocks plus ~3 live f32 temporaries (x32, ax, h)
    bytes_per_lane = V * (2 * in_bytes + 2 * 4 + 3 * 4)
    TN = _pick_block_lanes(N, bytes_per_lane)
    n_pad = pl.cdiv(N, TN) * TN
    if n_pad != N:                      # zero-pad lane axis to a multiple of TN
        xk = jnp.pad(xk, ((0, 0), (0, n_pad - N)))
    grid = (n_pad // TN,)

    yk = pl.pallas_call(
        _make_prop_kernel(gdep, alpha),
        out_shape=jax.ShapeDtypeStruct((V, n_pad), jnp.float32),
        grid_spec=pltpu.PrefetchScalarGridSpec(
            num_scalar_prefetch=0,
            grid=grid,
            in_specs=[
                pl.BlockSpec((V, TN), lambda i: (0, i)),   # lane-chunk of slab
                pl.BlockSpec((V, V), lambda i: (0, 0)),    # resident adjacency
            ],
            out_specs=pl.BlockSpec((V, TN), lambda i: (0, i)),
        ),
        compiler_params=pltpu.CompilerParams(
            dimension_semantics=("parallel",),
            vmem_limit_bytes=32 << 20,
        ),
    )(xk, ak)

    # Back to (B, Ck, V, L), then the remaining channel mix / bias in XLA.
    h = jnp.transpose(yk[:, :N].reshape(V, B, Ck, L), (1, 2, 0, 3))
    ho = h if conv_first else jnp.einsum('oc,bcvl->bovl', w, h)
    # TODO(synk): prop stores self.dropout but never applies it in forward().
    return ho + b[None, :, None, None]


if __name__ == "__main__":
    # Small shapes consistent with prop.forward: x (B, C_in, V, L), adj (V, V)
    B, C_IN, C_OUT, V, L = 2, 4, 8, 16, 8
    GDEP, ALPHA = 2, 0.05

    key = jax.random.PRNGKey(0)
    k1, k2, k3, k4 = jax.random.split(key, 4)
    x = jax.random.normal(k1, (B, C_IN, V, L), dtype=jnp.float32)
    adj = jax.random.uniform(k2, (V, V), dtype=jnp.float32)       # nonnegative
    weight = 0.1 * jax.random.normal(k3, (C_OUT, C_IN), dtype=jnp.float32)
    bias = 0.1 * jax.random.normal(k4, (C_OUT,), dtype=jnp.float32)

    out = prop_forward_pallas(x, adj, weight, bias, gdep=GDEP, alpha=ALPHA)
    out = jax.block_until_ready(out)
    assert out.shape == (B, C_OUT, V, L)

    # Pure-JAX reference of the PyTorch forward (HIGHEST-precision einsums).
    hp = lax.Precision.HIGHEST
    adj_i = adj + jnp.eye(V, dtype=jnp.float32)
    a_ref = adj_i / jnp.sum(adj_i, axis=1, keepdims=True)
    h = x
    for _ in range(GDEP):
        h = ALPHA * x + (1.0 - ALPHA) * jnp.einsum(
            'ncwl,vw->ncvl', h, a_ref, precision=hp)
    ref = jnp.einsum('oc,ncvl->novl', weight, h, precision=hp)
    ref = ref + bias[None, :, None, None]

    # Tolerance absorbs the bf16-operand / f32-accumulation MXU path vs the
    # HIGHEST-precision f32 XLA reference (gdep is small, values are O(1)).
    err = float(jnp.max(jnp.abs(out - ref)))
    assert jnp.allclose(out, ref, atol=3e-2, rtol=3e-2), err
    print("KERNEL_OK")
</pallas_src>

<mosaic_0001>
module attributes {stable_mosaic.version = 11 : i64} {
  func.func @kernel(%arg0: i32, %arg1: memref<16x128xbf16, #tpu.memory_space<vmem>>, %arg2: memref<16x16xbf16, #tpu.memory_space<vmem>>, %arg3: memref<16x128xf32, #tpu.memory_space<vmem>>) attributes {dimension_semantics = [#tpu.dimension_semantics<parallel>], iteration_bounds = array<i64: 1>, scalar_prefetch = 0 : i64, scratch_operands = 0 : i64, tpu.core_type = #tpu.core_type<tc>, window_params = [{transform_indices = @transform_0, window_bounds = array<i64: 16, 128>}, {pipeline_mode = #tpu.pipeline_mode<synchronous>, transform_indices = @transform_1, window_bounds = array<i64: 16, 16>}, {transform_indices = @transform_2, window_bounds = array<i64: 16, 128>}]} {
    %c0 = arith.constant 0 : index
    %c0_0 = arith.constant 0 : index
    %0 = vector.load %arg2[%c0, %c0_0] : memref<16x16xbf16, #tpu.memory_space<vmem>>, vector<16x16xbf16>
    %c0_1 = arith.constant 0 : index
    %c0_2 = arith.constant 0 : index
    %1 = vector.load %arg1[%c0_1, %c0_2] : memref<16x128xbf16, #tpu.memory_space<vmem>>, vector<16x128xbf16>
    %2 = arith.extf %1 : vector<16x128xbf16> to vector<16x128xf32>
    %cst = arith.constant 5.000000e-02 : f32
    %3 = vector.broadcast %cst : f32 to vector<16x128xf32>
    %4 = arith.mulf %3, %2 : vector<16x128xf32>
    %5 = arith.truncf %2 : vector<16x128xf32> to vector<16x128xbf16>
    %cst_3 = arith.constant dense<0.000000e+00> : vector<16x128xf32>
    %6 = tpu.matmul %0, %5, %cst_3 {dimension_numbers = #tpu.dot_dimension_numbers<[1], [0], [0], [1], [0, 0, 1, 1], [], []>} : vector<16x16xbf16>, vector<16x128xbf16>, vector<16x128xf32> -> vector<16x128xf32>
    %7 = arith.addf %4, %6 : vector<16x128xf32>
    %8 = arith.truncf %7 : vector<16x128xf32> to vector<16x128xbf16>
    %cst_4 = arith.constant dense<0.000000e+00> : vector<16x128xf32>
    %9 = tpu.matmul %0, %8, %cst_4 {dimension_numbers = #tpu.dot_dimension_numbers<[1], [0], [0], [1], [0, 0, 1, 1], [], []>} : vector<16x16xbf16>, vector<16x128xbf16>, vector<16x128xf32> -> vector<16x128xf32>
    %10 = arith.addf %4, %9 : vector<16x128xf32>
    %c0_5 = arith.constant 0 : index
    %c0_6 = arith.constant 0 : index
    %11 = vector.load %arg3[%c0_5, %c0_6] : memref<16x128xf32, #tpu.memory_space<vmem>>, vector<16x128xf32>
    tpu.vector_store %arg3[%c0_5, %c0_6], %10 {strides = array<i32>} : memref<16x128xf32, #tpu.memory_space<vmem>>, vector<16x128xf32>,
    return
  }
  func.func @transform_0(%arg0: i32) -> (i32, i32) {
    %c0_i32 = arith.constant 0 : i32
    %c0_i32_0 = arith.constant 0 : i32
    return %c0_i32, %arg0 : i32, i32
  }
  func.func @transform_1(%arg0: i32) -> (i32, i32) {
    %c0_i32 = arith.constant 0 : i32
    %c0_i32_0 = arith.constant 0 : i32
    %c0_i32_1 = arith.constant 0 : i32
    return %c0_i32, %c0_i32_0 : i32, i32
  }
  func.func @transform_2(%arg0: i32) -> (i32, i32) {
    %c0_i32 = arith.constant 0 : i32
    %c0_i32_0 = arith.constant 0 : i32
    return %c0_i32, %arg0 : i32, i32
  }
}

</mosaic_0001>

<llo_original>
// kernel: tpu_custom_call.1
$region0: #{tpu_custom_call.1}
  #allocation0 [shape = 'u32[]', space=smem, size = 0x4, offset = 0x4, fixed_abs, tag = 'smem constant byte address 0x4 - core index']
  #allocation1 [shape = 'u32[144,128]{1,0:T(1,128)}', space=vmem, size = 0x12000, scoped, tag = 'internal scratch']
  %s0 = inlined_call_operand.hbm [shape: bf16[16,128], index: 0, kind: input, shape index: {}]
  %s1 = inlined_call_operand.hbm [shape: bf16[16,16], index: 1, kind: input, shape index: {}]
  %s2 = inlined_call_operand.hbm [shape: f32[16,128], index: 2, kind: output, shape index: {}]
  %s3 = sld [smem:[#allocation0]]
  $region26: #{tpu_custom_call.1} parent=0
    _
  %s5 = ssub.s32 1, %s3
  %s6 = scalar_select 0, %s5, %s3
  $region1: #{tpu_custom_call.1} parent=0
    #allocation2 [shape = 'u8[4096]{0}', space=vmem, size = 0x1000, scoped, tag = 'input window, operand 0, single buffered']
    #allocation3 [shape = 's32[1]{0}', space=sflag, size = 0x4, scoped, tag = 'scoped memory for tpu_custom_call.1']
    #allocation4 [shape = 's32[1]{0}', space=sflag, size = 0x4, scoped, tag = 'scoped memory for tpu_custom_call.1']
    #allocation5 [shape = 'u8[4096]{0}', space=vmem, size = 0x1000, scoped, tag = 'input window, operand 1, single buffered']
    #allocation6 [shape = 's32[1]{0}', space=sflag, size = 0x4, scoped, tag = 'scoped memory for tpu_custom_call.1']
    #allocation7 [shape = 'u8[8192]{0}', space=vmem, size = 0x2000, scoped, tag = 'output window, operand 0, single buffered']
    %7 = vsyncpa [#allocation3], 0
    %8 = vsyncpa [#allocation6], 0
    %9 = vsyncpa [#allocation4], 0
    // Predicated region
    $region2: #{tpu_custom_call.1} parent=1 // pred_check
      _
    $region3: #{tpu_custom_call.1} parent=1 // pred_check_branch
      %11 = sbr.rel (0) target = $region5
    $region4: #{tpu_custom_call.1} parent=1 // pred_region
      %s13 = ssub.s32 128, 128
      %14 = vsyncadd [#allocation3], %s13
      %s15 = sshll.u32 [#allocation2], 4
      %s16 = int_to_ptr.vmem [resolvable:$true] %s15
      %21 = dma.hbm_to_vmem [thread:$0]  %s0, 128, %s16, [#allocation3], 64, 64, 4
    $region5: #{tpu_custom_call.1} parent=1 // pred_fallthru
      _
    // Predicated region
    $region6: #{tpu_custom_call.1} parent=1 // pred_check
      _
    $region7: #{tpu_custom_call.1} parent=1 // pred_check_branch
      %23 = sbr.rel (0) target = $region9
    $region8: #{tpu_custom_call.1} parent=1 // pred_region
      %s25 = ssub.s32 128, 128
      %26 = vsyncadd [#allocation6], %s25
      %s27 = sshll.u32 [#allocation5], 4
      %s28 = int_to_ptr.vmem [resolvable:$true] %s27
      %33 = dma.hbm_to_vmem [thread:$0]  %s1, 128, %s28, [#allocation6], 64, 64, 4
    $region9: #{tpu_custom_call.1} parent=1 // pred_fallthru
      _
    // Predicated region
    $region10: #{tpu_custom_call.1} parent=1 // pred_check
      _
    $region11: #{tpu_custom_call.1} parent=1 // pred_check_branch
      %35 = sbr.rel (0) target = $region13
    $region12: #{tpu_custom_call.1} parent=1 // pred_region
      %36 = dma.done [#allocation3], 128
    $region13: #{tpu_custom_call.1} parent=1 // pred_fallthru
      _
    // Predicated region
    $region14: #{tpu_custom_call.1} parent=1 // pred_check
      _
    $region15: #{tpu_custom_call.1} parent=1 // pred_check_branch
      %38 = sbr.rel (0) target = $region17
    $region16: #{tpu_custom_call.1} parent=1 // pred_region
      %39 = dma.done [#allocation6], 128
    $region17: #{tpu_custom_call.1} parent=1 // pred_fallthru
      _
    %v41 = vld [vmem:[#allocation5] sm:$0xf]
    %v42 = vld [vmem:[#allocation5 + $0x4] sm:$0xf]
    %v43 = vld [vmem:[#allocation2] sm:$0xf]
    %v44 = vld [vmem:[#allocation2 + $0x4] sm:$0xf]
    %v45 = vunpack.c.l.bf16 %v43
    %v46 = vunpack.c.l.bf16 %v44
    %v47 = vmul.f32 %v45, 0.05
    %v48 = vmul.f32 %v46, 0.05
    %v51 = vunpack.c.l.b16 %v41
    %v52 = vunpack.c.l.b16 %v42
    %v53 = vpack.c.b16 %v52, %v51
    %v56 = vunpack.c.l.b16 %v43
    %v57 = vunpack.c.l.b16 %v44
    %v58 = vpack.c.b16 %v57, %v56
    %vm60 = vcmask 130048
    %v62 = vsel %vm60, %v53, 0
    %64 = vmatprep.subr.bf16.mxu0 0
    %65 = vmatpush1.bf16.msra.mxu0 0
    %66 = vmatprep.subr.bf16.mxu0 0
    %67 = vmatpush1.bf16.msra.mxu0 0
    %68 = vmatprep.subr.bf16.mxu0 0
    %69 = vmatpush1.bf16.msra.mxu0 0
    %70 = vmatprep.subr.bf16.mxu0 0
    %71 = vmatpush1.bf16.msra.mxu0 0
    %72 = vmatprep.subr.bf16.mxu0 0
    %73 = vmatpush1.bf16.msra.mxu0 0
    %74 = vmatprep.subr.bf16.mxu0 0
    %75 = vmatpush1.bf16.msra.mxu0 0
    %76 = vmatprep.subr.bf16.mxu0 0
    %77 = vmatpush1.bf16.msra.mxu0 0
    %78 = vmatprep.subr.bf16.mxu0 0
    %79 = vmatpush1.bf16.msra.mxu0 %v58
    %80 = vmatprep.subr.bf16.mxu0 0
    %81 = vmatpush2.bf16.msra.mxu0 0
    %82 = vmatprep.subr.bf16.mxu0 0
    %83 = vmatpush2.bf16.msra.mxu0 0
    %84 = vmatprep.subr.bf16.mxu0 0
    %85 = vmatpush2.bf16.msra.mxu0 0
    %86 = vmatprep.subr.bf16.mxu0 0
    %87 = vmatpush2.bf16.msra.mxu0 0
    %88 = vmatprep.subr.bf16.mxu0 0
    %89 = vmatpush2.bf16.msra.mxu0 0
    %90 = vmatprep.subr.bf16.mxu0 0
    %91 = vmatpush2.bf16.msra.mxu0 0
    %92 = vmatprep.subr.bf16.mxu0 0
    %93 = vmatpush2.bf16.msra.mxu0 0
    %94 = vmatprep.subr.bf16.mxu0 0
    %95 = vmatpush2.bf16.msra.mxu0 0
    %96 = vmatprep.mubr.bf16.mxu0 0
    %97 = vmatmul.mubr.bf16.gmra.mxu0 %v62
    %v98 = vpop.f32.mrf.mxu0
    %v99 = vadd.f32 0.0, %v98
    %v100 = vpop.f32.mrf.mxu0
    %v101 = vpop.f32.mrf.mxu0
    %v102 = vadd.f32 0.0, %v101
    %v103 = vpop.f32.mrf.mxu0
    %104 = vdwg.mxu0
    %v105 = vadd.f32 %v47, %v99
    %v106 = vadd.f32 %v48, %v102
    %v107 = vpack.c.bf16 %v106, %v105
    %108 = vmatprep.subr.bf16.mxu0 0
    %109 = vmatpush1.bf16.msra.mxu0 0
    %110 = vmatprep.subr.bf16.mxu0 0
    %111 = vmatpush1.bf16.msra.mxu0 0
    %112 = vmatprep.subr.bf16.mxu0 0
    %113 = vmatpush1.bf16.msra.mxu0 0
    %114 = vmatprep.subr.bf16.mxu0 0
    %115 = vmatpush1.bf16.msra.mxu0 0
    %116 = vmatprep.subr.bf16.mxu0 0
    %117 = vmatpush1.bf16.msra.mxu0 0
    %118 = vmatprep.subr.bf16.mxu0 0
    %119 = vmatpush1.bf16.msra.mxu0 0
    %120 = vmatprep.subr.bf16.mxu0 0
    %121 = vmatpush1.bf16.msra.mxu0 0
    %122 = vmatprep.subr.bf16.mxu0 0
    %123 = vmatpush1.bf16.msra.mxu0 %v107
    %124 = vmatprep.subr.bf16.mxu0 0
    %125 = vmatpush2.bf16.msra.mxu0 0
    %126 = vmatprep.subr.bf16.mxu0 0
    %127 = vmatpush2.bf16.msra.mxu0 0
    %128 = vmatprep.subr.bf16.mxu0 0
    %129 = vmatpush2.bf16.msra.mxu0 0
    %130 = vmatprep.subr.bf16.mxu0 0
    %131 = vmatpush2.bf16.msra.mxu0 0
    %132 = vmatprep.subr.bf16.mxu0 0
    %133 = vmatpush2.bf16.msra.mxu0 0
    %134 = vmatprep.subr.bf16.mxu0 0
    %135 = vmatpush2.bf16.msra.mxu0 0
    %136 = vmatprep.subr.bf16.mxu0 0
    %137 = vmatpush2.bf16.msra.mxu0 0
    %138 = vmatprep.subr.bf16.mxu0 0
    %139 = vmatpush2.bf16.msra.mxu0 0
    %140 = vmatprep.mubr.bf16.mxu0 0
    %141 = vmatmul.mubr.bf16.gmra.mxu0 %v62
    %v142 = vpop.f32.mrf.mxu0
    %v143 = vadd.f32 0.0, %v142
    %v144 = vpop.f32.mrf.mxu0
    %v145 = vpop.f32.mrf.mxu0
    %v146 = vadd.f32 0.0, %v145
    %v147 = vpop.f32.mrf.mxu0
    %148 = vdwg.mxu0
    %v149 = vadd.f32 %v47, %v143
    %v150 = vadd.f32 %v48, %v146
    %151 = vst [vmem:[#allocation7] sm:$0xff] %v149
    %152 = vst [vmem:[#allocation7 + $0x8] sm:$0xff] %v150
    // Predicated region
    $region18: #{tpu_custom_call.1} parent=1 // pred_check
      _
    $region19: #{tpu_custom_call.1} parent=1 // pred_check_branch
      %154 = sbr.rel (0) target = $region21
    $region20: #{tpu_custom_call.1} parent=1 // pred_region
      %s156 = ssub.s32 256, 256
      %157 = vsyncadd [#allocation4], %s156
      %s158 = sshll.u32 [#allocation7], 4
      %s159 = int_to_ptr.vmem [resolvable:$true] %s158
      %164 = dma.vmem_to_hbm [thread:$0]  %s159, 256, %s2, [#allocation4], 128, 128, 8
    $region21: #{tpu_custom_call.1} parent=1 // pred_fallthru
      _
    // Predicated region
    $region22: #{tpu_custom_call.1} parent=1 // pred_check
      _
    $region23: #{tpu_custom_call.1} parent=1 // pred_check_branch
      %166 = sbr.rel (0) target = $region25
    $region24: #{tpu_custom_call.1} parent=1 // pred_region
      %167 = dma.done [#allocation4], 256
    $region25: #{tpu_custom_call.1} parent=1 // pred_fallthru
      _
    %168 = vsyncpa [#allocation3], 1
    %169 = vsyncpa [#allocation6], 1
    %170 = vsyncpa [#allocation4], 1

</llo_original>
